<compile_context>
chip_gen: v5e
topology: v5e:2x2
jax: 0.10.0
libtpu: 0.0.40
codegen_flags: <defaults>
</compile_context>

<pallas_src>
import jax
import jax.numpy as jnp
from jax.experimental import pallas as pl
from jax.experimental.pallas import tpu as pltpu


_N_INFLIGHT = 8  # depth of the per-row DMA ring in the HBM-gather fallback


def _round_up(x, m):
    return ((x + m - 1) // m) * m


def pad_embedding_table(table):
    """One-time (init-time) lane padding of the (V, D) table to (V, D_pad)."""
    v, d = table.shape
    d_pad = _round_up(d, 128)
    if d_pad == d:
        return table
    return jnp.pad(table, ((0, 0), (0, d_pad - d)))


def _resident_table_budget():
    """VMEM bytes we allow the resident-table fast path to use for the table."""
    try:
        cap = int(pltpu.get_tpu_info().vmem_capacity_bytes)
    except Exception:  # pragma: no cover - conservative fallback (v7x-sized)
        cap = 64 << 20
    # Leave headroom for double-buffered (TS, D_pad) output tiles + scratch.
    return int(cap * 0.4)


def _resident_gather_kernel(idx_ref, table_ref, out_ref):
    # idx_ref:   (S_pad,) int32 in SMEM (scalar prefetch)
    # table_ref: (V, D_pad) whole table, VMEM-resident (constant index_map)
    # out_ref:   (TS, D_pad) output tile for this grid step
    i = pl.program_id(0)
    ts = out_ref.shape[0]
    base = i * ts

    if ts <= 32:
        # Small tile: fully static row loop (static store offsets).
        for r in range(ts):
            row = idx_ref[base + r]
            out_ref[r, :] = table_ref[row, :]
    else:
        def copy_row(r, carry):
            row = idx_ref[base + r]
            out_ref[pl.ds(r, 1), :] = table_ref[pl.ds(row, 1), :]
            return carry

        jax.lax.fori_loop(0, ts, copy_row, 0, unroll=8)


def _hbm_gather_kernel(idx_ref, table_hbm_ref, out_ref, row_buf, row_sem):
    # idx_ref:       (S_pad,) int32 in SMEM (scalar prefetch)
    # table_hbm_ref: (V, D_pad) table left in HBM (memory_space=pl.ANY)
    # out_ref:       (TS, D_pad) output tile
    # row_buf:       (N, D_pad) VMEM ring of in-flight rows
    # row_sem:       (N,) DMA semaphores
    i = pl.program_id(0)
    ts = out_ref.shape[0]
    n = row_buf.shape[0]
    base = i * ts

    def start(r):
        slot = r % n
        row = idx_ref[base + r]
        pltpu.make_async_copy(
            table_hbm_ref.at[pl.ds(row, 1), :],
            row_buf.at[pl.ds(slot, 1), :],
            row_sem.at[slot],
        ).start()

    # Prime the ring with up to N row fetches in flight.
    @pl.loop(0, min(n, ts))
    def _(r):
        start(r)

    def body(r, carry):
        slot = r % n
        pltpu.make_async_copy(
            table_hbm_ref.at[pl.ds(0, 1), :],
            row_buf.at[pl.ds(slot, 1), :],
            row_sem.at[slot],
        ).wait()
        out_ref[pl.ds(r, 1), :] = row_buf[pl.ds(slot, 1), :]

        @pl.when(r + n < ts)
        def _():
            start(r + n)

        return carry

    jax.lax.fori_loop(0, ts, body, 0)


def word_embedding(indices, table_padded, embedding_dim, *, vmem_budget_bytes=None):
    """Pallas equivalent of nn.Embedding(V, D)(indices) for 1-D int indices.

    `table_padded` must be the init-time lane-padded table from
    `pad_embedding_table` (shape (V, D_pad), D_pad % 128 == 0).
    """
    V, D_pad = table_padded.shape
    assert D_pad % 128 == 0, "pre-pad the table once with pad_embedding_table()"
    S = int(indices.shape[0])
    itemsize = table_padded.dtype.itemsize

    # Tile-of-rows size: sublane-dense (multiple of 8), big enough to amortize
    # the ~0.35us/step grid overhead, small enough to keep >=4 grid steps for
    # v7x's two TensorCores when S is large.
    ts = 256
    while ts > 8 and pl.cdiv(S, ts) < 4:
        ts //= 2
    s_pad = pl.cdiv(S, ts) * ts
    grid = (s_pad // ts,)

    # Clamp so a bad index can never become an unchecked OOB access.
    # TODO(synk): PyTorch nn.Embedding raises on out-of-range indices; here they clamp.
    idx = jnp.clip(indices.astype(jnp.int32), 0, V - 1)
    if s_pad != S:
        idx = jnp.pad(idx, (0, s_pad - S))  # padded rows gather row 0, dropped below

    table_bytes = V * D_pad * itemsize
    if vmem_budget_bytes is None:
        vmem_budget_bytes = _resident_table_budget()
    resident = table_bytes <= vmem_budget_bytes

    out_shape = jax.ShapeDtypeStruct((s_pad, D_pad), table_padded.dtype)
    out_spec = pl.BlockSpec((ts, D_pad), lambda i, idx_ref: (i, 0))

    if resident:
        # Whole table streamed into VMEM once (constant index_map), gathered
        # in-kernel with dynamic row indexing.
        grid_spec = pltpu.PrefetchScalarGridSpec(
            num_scalar_prefetch=1,
            grid=grid,
            in_specs=[pl.BlockSpec((V, D_pad), lambda i, idx_ref: (0, 0))],
            out_specs=out_spec,
        )
        kernel = _resident_gather_kernel
        vmem_limit = max(
            16 << 20,
            table_bytes + 4 * ts * D_pad * itemsize + (4 << 20),
        )
        vmem_limit = min(vmem_limit, 128 << 20)
        bytes_accessed = table_bytes + s_pad * D_pad * itemsize + s_pad * 4
    else:
        # Large table: leave it in HBM and keep a ring of per-row DMAs in flight.
        grid_spec = pltpu.PrefetchScalarGridSpec(
            num_scalar_prefetch=1,
            grid=grid,
            in_specs=[pl.BlockSpec(memory_space=pl.ANY)],
            out_specs=out_spec,
            scratch_shapes=[
                pltpu.VMEM((_N_INFLIGHT, D_pad), table_padded.dtype),
                pltpu.SemaphoreType.DMA((_N_INFLIGHT,)),
            ],
        )
        kernel = _hbm_gather_kernel
        vmem_limit = None  # default scoped VMEM is plenty for ring + out tiles
        bytes_accessed = 2 * s_pad * D_pad * itemsize + s_pad * 4

    out = pl.pallas_call(
        kernel,
        out_shape=out_shape,
        grid_spec=grid_spec,
        compiler_params=pltpu.CompilerParams(
            # Each grid step writes a distinct output tile -> safe to shard the
            # S axis across v7x's 2 TensorCores (no-op on v5e/v6e).
            dimension_semantics=("parallel",),
            vmem_limit_bytes=vmem_limit,
        ),
        cost_estimate=pl.CostEstimate(
            flops=0,
            transcendentals=0,
            bytes_accessed=int(bytes_accessed),
        ),
    )(idx, table_padded)

    # Match nn.Embedding's (S, D) output layout.
    # TODO(synk): if the downstream consumer tolerates the lane-padded
    # (S_pad, D_pad) layout, return `out` directly and skip this extra copy.
    return out[:S, :embedding_dim]


if __name__ == "__main__":
    vocab_size = 6
    embedding_dim = 100

    # Deterministic parameter init (nn.Embedding default is N(0, 1)), padded
    # to a lane-dense (V, D_pad) layout ONCE at init time.
    key = jax.random.PRNGKey(0)
    embedding_table = jax.random.normal(
        key, (vocab_size, embedding_dim), dtype=jnp.float32
    )
    embedding_table_padded = pad_embedding_table(embedding_table)

    # Same input as the PyTorch script: torch.tensor([1, 2, 3, 4, 5])
    input_data = jnp.array([1, 2, 3, 4, 5], dtype=jnp.int32)

    embedded = word_embedding(input_data, embedding_table_padded, embedding_dim)
    embedded = jax.block_until_ready(embedded)

    # Sanity check against the plain-JAX gather reference.
    ref = embedding_table[input_data]
    assert embedded.shape == (5, embedding_dim)
    assert jnp.allclose(embedded, ref, atol=1e-6), "mismatch vs reference gather"

    print("KERNEL_OK")
</pallas_src>

<mosaic_0001>
module attributes {stable_mosaic.version = 11 : i64} {
  func.func @_resident_gather_kernel(%arg0: i32, %arg1: memref<8xi32, #tpu.memory_space<smem>>, %arg2: memref<6x128xf32, #tpu.memory_space<vmem>>, %arg3: memref<8x128xf32, #tpu.memory_space<vmem>>) attributes {dimension_semantics = [#tpu.dimension_semantics<parallel>], iteration_bounds = array<i64: 1>, scalar_prefetch = 1 : i64, scratch_operands = 0 : i64, tpu.core_type = #tpu.core_type<tc>, window_params = [{pipeline_mode = #tpu.pipeline_mode<synchronous>, transform_indices = @transform_0, window_bounds = array<i64: 6, 128>}, {transform_indices = @transform_1, window_bounds = array<i64: 8, 128>}]} {
    %c8_i32 = arith.constant 8 : i32
    %0 = arith.muli %arg0, %c8_i32 : i32
    %c0_i32 = arith.constant 0 : i32
    %1 = arith.addi %0, %c0_i32 : i32
    %2 = arith.index_cast %1 : i32 to index
    %3 = memref.load %arg1[%2] : memref<8xi32, #tpu.memory_space<smem>>
    %4 = arith.index_cast %3 : i32 to index
    %c0 = arith.constant 0 : index
    %5 = vector.load %arg2[%4, %c0] : memref<6x128xf32, #tpu.memory_space<vmem>>, vector<1x128xf32>
    %6 = vector.shape_cast %5 : vector<1x128xf32> to vector<128xf32>
    %c0_0 = arith.constant 0 : index
    %c0_1 = arith.constant 0 : index
    %7 = vector.load %arg3[%c0_0, %c0_1] : memref<8x128xf32, #tpu.memory_space<vmem>>, vector<1x128xf32>
    %8 = vector.shape_cast %7 : vector<1x128xf32> to vector<128xf32>
    %9 = vector.shape_cast %6 : vector<128xf32> to vector<1x128xf32>
    tpu.vector_store %arg3[%c0_0, %c0_1], %9 {strides = array<i32>} : memref<8x128xf32, #tpu.memory_space<vmem>>, vector<1x128xf32>,
    %c1_i32 = arith.constant 1 : i32
    %10 = arith.addi %0, %c1_i32 : i32
    %11 = arith.index_cast %10 : i32 to index
    %12 = memref.load %arg1[%11] : memref<8xi32, #tpu.memory_space<smem>>
    %13 = arith.index_cast %12 : i32 to index
    %c0_2 = arith.constant 0 : index
    %14 = vector.load %arg2[%13, %c0_2] : memref<6x128xf32, #tpu.memory_space<vmem>>, vector<1x128xf32>
    %15 = vector.shape_cast %14 : vector<1x128xf32> to vector<128xf32>
    %c1 = arith.constant 1 : index
    %c0_3 = arith.constant 0 : index
    %16 = vector.load %arg3[%c1, %c0_3] : memref<8x128xf32, #tpu.memory_space<vmem>>, vector<1x128xf32>
    %17 = vector.shape_cast %16 : vector<1x128xf32> to vector<128xf32>
    %18 = vector.shape_cast %15 : vector<128xf32> to vector<1x128xf32>
    tpu.vector_store %arg3[%c1, %c0_3], %18 {strides = array<i32>} : memref<8x128xf32, #tpu.memory_space<vmem>>, vector<1x128xf32>,
    %c2_i32 = arith.constant 2 : i32
    %19 = arith.addi %0, %c2_i32 : i32
    %20 = arith.index_cast %19 : i32 to index
    %21 = memref.load %arg1[%20] : memref<8xi32, #tpu.memory_space<smem>>
    %22 = arith.index_cast %21 : i32 to index
    %c0_4 = arith.constant 0 : index
    %23 = vector.load %arg2[%22, %c0_4] : memref<6x128xf32, #tpu.memory_space<vmem>>, vector<1x128xf32>
    %24 = vector.shape_cast %23 : vector<1x128xf32> to vector<128xf32>
    %c2 = arith.constant 2 : index
    %c0_5 = arith.constant 0 : index
    %25 = vector.load %arg3[%c2, %c0_5] : memref<8x128xf32, #tpu.memory_space<vmem>>, vector<1x128xf32>
    %26 = vector.shape_cast %25 : vector<1x128xf32> to vector<128xf32>
    %27 = vector.shape_cast %24 : vector<128xf32> to vector<1x128xf32>
    tpu.vector_store %arg3[%c2, %c0_5], %27 {strides = array<i32>} : memref<8x128xf32, #tpu.memory_space<vmem>>, vector<1x128xf32>,
    %c3_i32 = arith.constant 3 : i32
    %28 = arith.addi %0, %c3_i32 : i32
    %29 = arith.index_cast %28 : i32 to index
    %30 = memref.load %arg1[%29] : memref<8xi32, #tpu.memory_space<smem>>
    %31 = arith.index_cast %30 : i32 to index
    %c0_6 = arith.constant 0 : index
    %32 = vector.load %arg2[%31, %c0_6] : memref<6x128xf32, #tpu.memory_space<vmem>>, vector<1x128xf32>
    %33 = vector.shape_cast %32 : vector<1x128xf32> to vector<128xf32>
    %c3 = arith.constant 3 : index
    %c0_7 = arith.constant 0 : index
    %34 = vector.load %arg3[%c3, %c0_7] : memref<8x128xf32, #tpu.memory_space<vmem>>, vector<1x128xf32>
    %35 = vector.shape_cast %34 : vector<1x128xf32> to vector<128xf32>
    %36 = vector.shape_cast %33 : vector<128xf32> to vector<1x128xf32>
    tpu.vector_store %arg3[%c3, %c0_7], %36 {strides = array<i32>} : memref<8x128xf32, #tpu.memory_space<vmem>>, vector<1x128xf32>,
    %c4_i32 = arith.constant 4 : i32
    %37 = arith.addi %0, %c4_i32 : i32
    %38 = arith.index_cast %37 : i32 to index
    %39 = memref.load %arg1[%38] : memref<8xi32, #tpu.memory_space<smem>>
    %40 = arith.index_cast %39 : i32 to index
    %c0_8 = arith.constant 0 : index
    %41 = vector.load %arg2[%40, %c0_8] : memref<6x128xf32, #tpu.memory_space<vmem>>, vector<1x128xf32>
    %42 = vector.shape_cast %41 : vector<1x128xf32> to vector<128xf32>
    %c4 = arith.constant 4 : index
    %c0_9 = arith.constant 0 : index
    %43 = vector.load %arg3[%c4, %c0_9] : memref<8x128xf32, #tpu.memory_space<vmem>>, vector<1x128xf32>
    %44 = vector.shape_cast %43 : vector<1x128xf32> to vector<128xf32>
    %45 = vector.shape_cast %42 : vector<128xf32> to vector<1x128xf32>
    tpu.vector_store %arg3[%c4, %c0_9], %45 {strides = array<i32>} : memref<8x128xf32, #tpu.memory_space<vmem>>, vector<1x128xf32>,
    %c5_i32 = arith.constant 5 : i32
    %46 = arith.addi %0, %c5_i32 : i32
    %47 = arith.index_cast %46 : i32 to index
    %48 = memref.load %arg1[%47] : memref<8xi32, #tpu.memory_space<smem>>
    %49 = arith.index_cast %48 : i32 to index
    %c0_10 = arith.constant 0 : index
    %50 = vector.load %arg2[%49, %c0_10] : memref<6x128xf32, #tpu.memory_space<vmem>>, vector<1x128xf32>
    %51 = vector.shape_cast %50 : vector<1x128xf32> to vector<128xf32>
    %c5 = arith.constant 5 : index
    %c0_11 = arith.constant 0 : index
    %52 = vector.load %arg3[%c5, %c0_11] : memref<8x128xf32, #tpu.memory_space<vmem>>, vector<1x128xf32>
    %53 = vector.shape_cast %52 : vector<1x128xf32> to vector<128xf32>
    %54 = vector.shape_cast %51 : vector<128xf32> to vector<1x128xf32>
    tpu.vector_store %arg3[%c5, %c0_11], %54 {strides = array<i32>} : memref<8x128xf32, #tpu.memory_space<vmem>>, vector<1x128xf32>,
    %c6_i32 = arith.constant 6 : i32
    %55 = arith.addi %0, %c6_i32 : i32
    %56 = arith.index_cast %55 : i32 to index
    %57 = memref.load %arg1[%56] : memref<8xi32, #tpu.memory_space<smem>>
    %58 = arith.index_cast %57 : i32 to index
    %c0_12 = arith.constant 0 : index
    %59 = vector.load %arg2[%58, %c0_12] : memref<6x128xf32, #tpu.memory_space<vmem>>, vector<1x128xf32>
    %60 = vector.shape_cast %59 : vector<1x128xf32> to vector<128xf32>
    %c6 = arith.constant 6 : index
    %c0_13 = arith.constant 0 : index
    %61 = vector.load %arg3[%c6, %c0_13] : memref<8x128xf32, #tpu.memory_space<vmem>>, vector<1x128xf32>
    %62 = vector.shape_cast %61 : vector<1x128xf32> to vector<128xf32>
    %63 = vector.shape_cast %60 : vector<128xf32> to vector<1x128xf32>
    tpu.vector_store %arg3[%c6, %c0_13], %63 {strides = array<i32>} : memref<8x128xf32, #tpu.memory_space<vmem>>, vector<1x128xf32>,
    %c7_i32 = arith.constant 7 : i32
    %64 = arith.addi %0, %c7_i32 : i32
    %65 = arith.index_cast %64 : i32 to index
    %66 = memref.load %arg1[%65] : memref<8xi32, #tpu.memory_space<smem>>
    %67 = arith.index_cast %66 : i32 to index
    %c0_14 = arith.constant 0 : index
    %68 = vector.load %arg2[%67, %c0_14] : memref<6x128xf32, #tpu.memory_space<vmem>>, vector<1x128xf32>
    %69 = vector.shape_cast %68 : vector<1x128xf32> to vector<128xf32>
    %c7 = arith.constant 7 : index
    %c0_15 = arith.constant 0 : index
    %70 = vector.load %arg3[%c7, %c0_15] : memref<8x128xf32, #tpu.memory_space<vmem>>, vector<1x128xf32>
    %71 = vector.shape_cast %70 : vector<1x128xf32> to vector<128xf32>
    %72 = vector.shape_cast %69 : vector<128xf32> to vector<1x128xf32>
    tpu.vector_store %arg3[%c7, %c0_15], %72 {strides = array<i32>} : memref<8x128xf32, #tpu.memory_space<vmem>>, vector<1x128xf32>,
    return
  }
  func.func @transform_0(%arg0: i32, %arg1: memref<8xi32, #tpu.memory_space<smem>>) -> (i32, i32) {
    %c0_i32 = arith.constant 0 : i32
    %c0_i32_0 = arith.constant 0 : i32
    %c0_i32_1 = arith.constant 0 : i32
    return %c0_i32, %c0_i32_0 : i32, i32
  }
  func.func @transform_1(%arg0: i32, %arg1: memref<8xi32, #tpu.memory_space<smem>>) -> (i32, i32) {
    %c0_i32 = arith.constant 0 : i32
    %c0_i32_0 = arith.constant 0 : i32
    return %arg0, %c0_i32 : i32, i32
  }
}

</mosaic_0001>

<llo_original>
// kernel: tpu_custom_call.1
$region0: #{tpu_custom_call.1}
  #allocation0 [shape = 'u32[]', space=smem, size = 0x4, offset = 0x4, fixed_abs, tag = 'smem constant byte address 0x4 - core index']
  #allocation1 [shape = 'u32[72,128]{1,0:T(1,128)}', space=vmem, size = 0x9000, scoped, tag = 'internal scratch']
  #allocation2 [shape = 's32[1]{0}', space=sflag, size = 0x4, scoped, tag = 'scoped memory for tpu_custom_call.1']
  #allocation3 [shape = 'u8[512]{0}', space=smem, size = 0x200, scoped, tag = 'prefetched SMEM operand 0']
  %s0 = inlined_call_operand.hbm [shape: s32[8], index: 0, kind: input, shape index: {}]
  %s1 = inlined_call_operand.hbm [shape: f32[6,128], index: 1, kind: input, shape index: {}]
  %s2 = inlined_call_operand.hbm [shape: f32[8,128], index: 2, kind: output, shape index: {}]
  %s3 = sld [smem:[#allocation0]]
  $region18: #{tpu_custom_call.1} parent=0
    _
  %s5 = ssub.s32 1, %s3
  %s6 = scalar_select 0, %s5, %s3
  %s8 = sshll.u32 %s0, 4
  %s9 = int_to_ptr.hbm [resolvable:$true] %s8
  %11 = dma.hbm_to_smem %s9, 16, [#allocation3], [#allocation2]
  %13 = dma.done [#allocation2], 16
  %14 = sfence
  $region1: #{tpu_custom_call.1} parent=0
    #allocation4 [shape = 'u8[4096]{0}', space=vmem, size = 0x1000, scoped, tag = 'input window, operand 1, single buffered']
    #allocation5 [shape = 's32[1]{0}', space=sflag, size = 0x4, scoped, tag = 'scoped memory for tpu_custom_call.1']
    #allocation6 [shape = 's32[1]{0}', space=sflag, size = 0x4, scoped, tag = 'scoped memory for tpu_custom_call.1']
    #allocation7 [shape = 'u8[4096]{0}', space=vmem, size = 0x1000, scoped, tag = 'output window, operand 0, single buffered']
    %15 = vsyncpa [#allocation5], 0
    %16 = vsyncpa [#allocation6], 0
    // Predicated region
    $region2: #{tpu_custom_call.1} parent=1 // pred_check
      _
    $region3: #{tpu_custom_call.1} parent=1 // pred_check_branch
      %18 = sbr.rel (0) target = $region5
    $region4: #{tpu_custom_call.1} parent=1 // pred_region
      %20 = vsyncadd [#allocation5], 0
      %s22 = sshll.u32 %s1, 4
      %s23 = int_to_ptr.hbm [resolvable:$true] %s22
      %s24 = sshll.u32 [#allocation4], 4
      %s25 = int_to_ptr.vmem [resolvable:$true] %s24
      %27 = dma.hbm_to_vmem [thread:$0]  %s23, 128, %s25, [#allocation5]
    $region5: #{tpu_custom_call.1} parent=1 // pred_fallthru
      _
    // Predicated region
    $region6: #{tpu_custom_call.1} parent=1 // pred_check
      _
    $region7: #{tpu_custom_call.1} parent=1 // pred_check_branch
      %29 = sbr.rel (0) target = $region9
    $region8: #{tpu_custom_call.1} parent=1 // pred_region
      %31 = dma.done [#allocation5], 128
    $region9: #{tpu_custom_call.1} parent=1 // pred_fallthru
      _
    %s32 = smul.u32 0, 8
    %s33 = sld [smem:[#allocation3 + %s32]]
    %s34 = scalar_lea.vmem [#allocation4], %s33
    %v35 = vld [vmem:[%s34] sm:$0x1]
    %36 = vst [vmem:[#allocation7] sm:$0x1] %v35
    %s37 = sadd.s32 %s32, 1
    %s38 = sld [smem:[#allocation3 + %s37]]
    %s39 = scalar_lea.vmem [#allocation4], %s38
    %v40 = vld [vmem:[%s39] sm:$0x1]
    %41 = vst [vmem:[#allocation7 + $0x1] sm:$0x1] %v40
    %s42 = sadd.s32 %s32, 2
    %s43 = sld [smem:[#allocation3 + %s42]]
    %s44 = scalar_lea.vmem [#allocation4], %s43
    %v45 = vld [vmem:[%s44] sm:$0x1]
    %46 = vst [vmem:[#allocation7 + $0x2] sm:$0x1] %v45
    %s47 = sadd.s32 %s32, 3
    %s48 = sld [smem:[#allocation3 + %s47]]
    %s49 = scalar_lea.vmem [#allocation4], %s48
    %v50 = vld [vmem:[%s49] sm:$0x1]
    %51 = vst [vmem:[#allocation7 + $0x3] sm:$0x1] %v50
    %s52 = sadd.s32 %s32, 4
    %s53 = sld [smem:[#allocation3 + %s52]]
    %s54 = scalar_lea.vmem [#allocation4], %s53
    %v55 = vld [vmem:[%s54] sm:$0x1]
    %56 = vst [vmem:[#allocation7 + $0x4] sm:$0x1] %v55
    %s57 = sadd.s32 %s32, 5
    %s58 = sld [smem:[#allocation3 + %s57]]
    %s59 = scalar_lea.vmem [#allocation4], %s58
    %v60 = vld [vmem:[%s59] sm:$0x1]
    %61 = vst [vmem:[#allocation7 + $0x5] sm:$0x1] %v60
    %s62 = sadd.s32 %s32, 6
    %s63 = sld [smem:[#allocation3 + %s62]]
    %s64 = scalar_lea.vmem [#allocation4], %s63
    %v65 = vld [vmem:[%s64] sm:$0x1]
    %66 = vst [vmem:[#allocation7 + $0x6] sm:$0x1] %v65
    %s67 = sadd.s32 %s32, 7
    %s68 = sld [smem:[#allocation3 + %s67]]
    %s69 = scalar_lea.vmem [#allocation4], %s68
    %v70 = vld [vmem:[%s69] sm:$0x1]
    %71 = vst [vmem:[#allocation7 + $0x7] sm:$0x1] %v70
    // Predicated region
    $region10: #{tpu_custom_call.1} parent=1 // pred_check
      _
    $region11: #{tpu_custom_call.1} parent=1 // pred_check_branch
      %73 = sbr.rel (0) target = $region13
    $region12: #{tpu_custom_call.1} parent=1 // pred_region
      %75 = vsyncadd [#allocation6], 0
      %s77 = sshll.u32 [#allocation7], 4
      %s78 = int_to_ptr.vmem [resolvable:$true] %s77
      %s79 = sshll.u32 %s2, 4
      %s80 = int_to_ptr.hbm [resolvable:$true] %s79
      %82 = dma.vmem_to_hbm [thread:$0]  %s78, 128, %s80, [#allocation6]
    $region13: #{tpu_custom_call.1} parent=1 // pred_fallthru
      _
    // Predicated region
    $region14: #{tpu_custom_call.1} parent=1 // pred_check
      _
    $region15: #{tpu_custom_call.1} parent=1 // pred_check_branch
      %84 = sbr.rel (0) target = $region17
    $region16: #{tpu_custom_call.1} parent=1 // pred_region
      %86 = dma.done [#allocation6], 128
    $region17: #{tpu_custom_call.1} parent=1 // pred_fallthru
      _
    %87 = vsyncpa [#allocation5], 1
    %88 = vsyncpa [#allocation6], 1

</llo_original>
